<compile_context>
chip_gen: v7x
topology: tpu7x:2x2x1
jax: 0.10.0
libtpu: 0.0.40
codegen_flags: <defaults>
</compile_context>

<pallas_src>
import functools
import math

import jax
import jax.numpy as jnp
from jax import lax
from jax.experimental import pallas as pl
from jax.experimental.pallas import tpu as pltpu

# Keep every f32 matmul (kernel + pure-JAX reference) at full precision so the
# correctness check is tight.
jax.config.update("jax_default_matmul_precision", "highest")

_VMEM_FLOOR = 32 * 1024 * 1024
_VMEM_CAP = 64 * 1024 * 1024


def _vmem_limit(block_bytes):
    # ~2x live blocks (double buffering) + slack, clamped to [32 MiB, 64 MiB].
    return int(max(_VMEM_FLOOR, min(_VMEM_CAP, 2 * block_bytes + (1 << 20))))


def _pick_tile(dim, target):
    # Biggest clean tile: `target` if it divides `dim`, otherwise the full dim.
    # Never pads, so the wrapper never materializes an extra HBM copy.
    if dim <= target or dim % target != 0:
        return dim
    return target


# ---------------------------------------------------------------------------
# Linear:  y = x @ w + b   (the math of nn.Linear, with w stored as (in, out))
# ---------------------------------------------------------------------------
def _linear_kernel(x_ref, w_ref, b_ref, o_ref, acc_ref):
    k = pl.program_id(2)

    @pl.when(k == 0)
    def _init():
        acc_ref[...] = jnp.zeros_like(acc_ref)

    acc_ref[...] += jnp.dot(
        x_ref[...],
        w_ref[...],
        preferred_element_type=jnp.float32,
    )

    @pl.when(k == pl.num_programs(2) - 1)
    def _finalize():
        o_ref[...] = (acc_ref[...] + b_ref[...].astype(jnp.float32)).astype(o_ref.dtype)


def linear(x, w, b, *, tm=256, tn=256, tk=512):
    m, kdim = x.shape
    _, n = w.shape
    tm = _pick_tile(m, tm)
    tn = _pick_tile(n, tn)
    tk = _pick_tile(kdim, tk)
    b2 = b.reshape(1, n)

    block_bytes = 4 * (tm * tk + tk * tn + 2 * tm * tn + tn)  # f32 worst case + acc

    return pl.pallas_call(
        _linear_kernel,
        out_shape=jax.ShapeDtypeStruct((m, n), x.dtype),
        grid_spec=pltpu.PrefetchScalarGridSpec(
            num_scalar_prefetch=0,
            grid=(m // tm, n // tn, kdim // tk),
            in_specs=[
                pl.BlockSpec((tm, tk), lambda i, j, k: (i, k)),
                pl.BlockSpec((tk, tn), lambda i, j, k: (k, j)),
                pl.BlockSpec((1, tn), lambda i, j, k: (0, j)),
            ],
            out_specs=pl.BlockSpec((tm, tn), lambda i, j, k: (i, j)),
            scratch_shapes=[pltpu.VMEM((tm, tn), jnp.float32)],
        ),
        compiler_params=pltpu.CompilerParams(
            dimension_semantics=("parallel", "parallel", "arbitrary"),
            vmem_limit_bytes=_vmem_limit(block_bytes),
        ),
    )(x, w, b2)


# ---------------------------------------------------------------------------
# Attention:  softmax(q @ k^T / sqrt(dk) [+ mask], over keys) @ v, per head
# ---------------------------------------------------------------------------
def _attention_body(q_ref, k_ref, v_ref, mask_ref, o_ref, scale):
    # Scale folded into q: (tq, dk) multiply instead of (tq, T).
    q = q_ref[0].astype(jnp.float32) * scale  # (tq, dk)
    k = k_ref[0].astype(jnp.float32)          # (T,  dk)
    v = v_ref[0].astype(jnp.float32)          # (T,  dv)

    s = jnp.dot(q, k.T, preferred_element_type=jnp.float32)  # (tq, T)
    if mask_ref is not None:
        s = s + mask_ref[0].astype(jnp.float32)

    s_max = jnp.max(s, axis=-1, keepdims=True)
    p = jnp.exp(s - s_max)
    denom = jnp.sum(p, axis=-1, keepdims=True)
    a = jnp.dot(p, v, preferred_element_type=jnp.float32)  # (tq, dv)
    o_ref[0] = (a / denom).astype(o_ref.dtype)


def _attention_kernel(q_ref, k_ref, v_ref, o_ref, *, scale):
    _attention_body(q_ref, k_ref, v_ref, None, o_ref, scale)


def _attention_kernel_masked(q_ref, k_ref, v_ref, mask_ref, o_ref, *, scale):
    _attention_body(q_ref, k_ref, v_ref, mask_ref, o_ref, scale)


def attention(qh, kh, vh, mask=None, *, tq=256):
    nhead, T, dk = qh.shape
    dv = vh.shape[-1]
    scale = 1.0 / math.sqrt(dk)
    tq = _pick_tile(T, tq)

    inputs = [qh, kh, vh]
    in_specs = [
        pl.BlockSpec((1, tq, dk), lambda h, qi: (h, qi, 0)),
        pl.BlockSpec((1, T, dk), lambda h, qi: (h, 0, 0)),
        pl.BlockSpec((1, T, dv), lambda h, qi: (h, 0, 0)),
    ]
    if mask is not None:
        mask3 = jnp.broadcast_to(mask, (nhead, T, T)).astype(jnp.float32)
        inputs.append(mask3)
        in_specs.append(pl.BlockSpec((1, tq, T), lambda h, qi: (h, qi, 0)))
        kernel = functools.partial(_attention_kernel_masked, scale=scale)
    else:
        kernel = functools.partial(_attention_kernel, scale=scale)

    block_bytes = 4 * (tq * dk + T * dk + T * dv + tq * dv + tq * T)

    return pl.pallas_call(
        kernel,
        out_shape=jax.ShapeDtypeStruct((nhead, T, dv), qh.dtype),
        grid_spec=pltpu.PrefetchScalarGridSpec(
            num_scalar_prefetch=0,
            grid=(nhead, T // tq),
            in_specs=in_specs,
            out_specs=pl.BlockSpec((1, tq, dv), lambda h, qi: (h, qi, 0)),
        ),
        compiler_params=pltpu.CompilerParams(
            dimension_semantics=("parallel", "parallel"),
            vmem_limit_bytes=_vmem_limit(block_bytes),
        ),
    )(*inputs)


# ---------------------------------------------------------------------------
# Full MHA forward (replicates the PyTorch module's reshapes exactly)
# ---------------------------------------------------------------------------
def mha_forward(Q, K, V, params, *, T, dk, dv, nhead, mask=None):
    Wq, bq, Wk, bk, Wv, bv, Wo, bo = params

    Qs = linear(Q, Wq, bq)  # (T, nhead*dk)
    Ks = linear(K, Wk, bk)  # (T, nhead*dk)
    Vs = linear(V, Wv, bv)  # (T, nhead*dv)

    # The module's raw reshape (NOT the usual split-heads) followed by transpose(1, 2).
    Qh = jnp.transpose(Qs.reshape(nhead, dk, T), (0, 2, 1))  # (nhead, T, dk)
    Kh = jnp.transpose(Ks.reshape(nhead, dk, T), (0, 2, 1))  # (nhead, T, dk)
    Vh = jnp.transpose(Vs.reshape(nhead, dv, T), (0, 2, 1))  # (nhead, T, dv)

    A = attention(Qh, Kh, Vh, mask)  # (nhead, T, dv)

    # A = transpose(A, 1, -1).reshape(-1, T).T
    A2 = jnp.transpose(A, (0, 2, 1)).reshape(nhead * dv, T).T  # (T, nhead*dv)
    return linear(A2, Wo, bo)  # (T, d_model)


def mha_reference(Q, K, V, params, *, T, dk, dv, nhead, mask=None):
    Wq, bq, Wk, bk, Wv, bv, Wo, bo = params
    hp = lax.Precision.HIGHEST
    Qs = jnp.dot(Q, Wq, precision=hp) + bq
    Ks = jnp.dot(K, Wk, precision=hp) + bk
    Vs = jnp.dot(V, Wv, precision=hp) + bv
    Qh = jnp.transpose(Qs.reshape(nhead, dk, T), (0, 2, 1))
    Kh = jnp.transpose(Ks.reshape(nhead, dk, T), (0, 2, 1))
    Vh = jnp.transpose(Vs.reshape(nhead, dv, T), (0, 2, 1))
    S = jnp.einsum("hqd,hkd->hqk", Qh, Kh, precision=hp) / math.sqrt(dk)
    if mask is not None:
        S = S + mask
    P = jax.nn.softmax(S, axis=-1)
    A = jnp.einsum("hqk,hkd->hqd", P, Vh, precision=hp)
    A2 = jnp.transpose(A, (0, 2, 1)).reshape(nhead * dv, T).T
    return jnp.dot(A2, Wo, precision=hp) + bo


if __name__ == "__main__":
    # Small shapes implied by the module: seq T=8, hidden d_model=32, 4 heads.
    T, d_model, dk, dv, nhead = 8, 32, 16, 32, 4

    key = jax.random.PRNGKey(0)
    keys = jax.random.split(key, 11)
    Q = jax.random.normal(keys[0], (T, d_model), jnp.float32)
    K = jax.random.normal(keys[1], (T, d_model), jnp.float32)
    V = jax.random.normal(keys[2], (T, d_model), jnp.float32)

    def _w(k, shape):
        return jax.random.normal(k, shape, jnp.float32) * 0.1

    params = (
        _w(keys[3], (d_model, nhead * dk)), _w(keys[4], (nhead * dk,)),   # Qs
        _w(keys[5], (d_model, nhead * dk)), _w(keys[6], (nhead * dk,)),   # Ks
        _w(keys[7], (d_model, nhead * dv)), _w(keys[8], (nhead * dv,)),   # Vs
        _w(keys[9], (nhead * dv, d_model)), _w(keys[10], (d_model,)),     # out
    )

    out = mha_forward(Q, K, V, params, T=T, dk=dk, dv=dv, nhead=nhead)
    out = jax.block_until_ready(out)

    ref = mha_reference(Q, K, V, params, T=T, dk=dk, dv=dv, nhead=nhead)
    assert out.shape == (T, d_model)
    max_err = float(jnp.max(jnp.abs(out - ref)))
    assert max_err < 2e-3, f"max abs err {max_err}"

    print("KERNEL_OK")
</pallas_src>

<mosaic_0001>
module attributes {stable_mosaic.version = 11 : i64} {
  func.func @_linear_kernel(%arg0: i32, %arg1: i32, %arg2: i32, %arg3: memref<8x32xf32, #tpu.memory_space<vmem>>, %arg4: memref<32x64xf32, #tpu.memory_space<vmem>>, %arg5: memref<1x64xf32, #tpu.memory_space<vmem>>, %arg6: memref<8x64xf32, #tpu.memory_space<vmem>>, %arg7: memref<8x64xf32, #tpu.memory_space<vmem>>) attributes {dimension_semantics = [#tpu.dimension_semantics<parallel>, #tpu.dimension_semantics<parallel>, #tpu.dimension_semantics<arbitrary>], iteration_bounds = array<i64: 1, 1, 1>, scalar_prefetch = 0 : i64, scratch_operands = 1 : i64, tpu.core_type = #tpu.core_type<tc>, window_params = [{transform_indices = @transform_0, window_bounds = array<i64: 8, 32>}, {transform_indices = @transform_1, window_bounds = array<i64: 32, 64>}, {transform_indices = @transform_2, window_bounds = array<i64: 1, 64>}, {transform_indices = @transform_3, window_bounds = array<i64: 8, 64>}]} {
    %c0_i32 = arith.constant 0 : i32
    %0 = arith.cmpi eq, %arg2, %c0_i32 : i32
    %1 = arith.extui %0 : i1 to i32
    %c0_i32_0 = arith.constant 0 : i32
    %2 = arith.cmpi ne, %1, %c0_i32_0 : i32
    scf.if %2 {
      %cst_10 = arith.constant 0.000000e+00 : f32
      %12 = vector.broadcast %cst_10 : f32 to vector<8x64xf32>
      %c0_11 = arith.constant 0 : index
      %c0_12 = arith.constant 0 : index
      %13 = vector.load %arg7[%c0_11, %c0_12] : memref<8x64xf32, #tpu.memory_space<vmem>>, vector<8x64xf32>
      tpu.vector_store %arg7[%c0_11, %c0_12], %12 {strides = array<i32>} : memref<8x64xf32, #tpu.memory_space<vmem>>, vector<8x64xf32>,
    } else {
    }
    %c0 = arith.constant 0 : index
    %c0_1 = arith.constant 0 : index
    %3 = vector.load %arg7[%c0, %c0_1] : memref<8x64xf32, #tpu.memory_space<vmem>>, vector<8x64xf32>
    %c0_2 = arith.constant 0 : index
    %c0_3 = arith.constant 0 : index
    %4 = vector.load %arg3[%c0_2, %c0_3] : memref<8x32xf32, #tpu.memory_space<vmem>>, vector<8x32xf32>
    %c0_4 = arith.constant 0 : index
    %c0_5 = arith.constant 0 : index
    %5 = vector.load %arg4[%c0_4, %c0_5] : memref<32x64xf32, #tpu.memory_space<vmem>>, vector<32x64xf32>
    %cst = arith.constant dense<0.000000e+00> : vector<8x64xf32>
    %6 = tpu.matmul %4, %5, %cst {dimension_numbers = #tpu.dot_dimension_numbers<[1], [0], [0], [1], [0, 0, 1, 1], [], []>, precision = #tpu.contract_precision<fp32>} : vector<8x32xf32>, vector<32x64xf32>, vector<8x64xf32> -> vector<8x64xf32>
    %7 = arith.addf %3, %6 : vector<8x64xf32>
    %c0_6 = arith.constant 0 : index
    %c0_7 = arith.constant 0 : index
    %8 = vector.load %arg7[%c0_6, %c0_7] : memref<8x64xf32, #tpu.memory_space<vmem>>, vector<8x64xf32>
    tpu.vector_store %arg7[%c0_6, %c0_7], %7 {strides = array<i32>} : memref<8x64xf32, #tpu.memory_space<vmem>>, vector<8x64xf32>,
    %c0_i32_8 = arith.constant 0 : i32
    %9 = arith.cmpi eq, %arg2, %c0_i32_8 : i32
    %10 = arith.extui %9 : i1 to i32
    %c0_i32_9 = arith.constant 0 : i32
    %11 = arith.cmpi ne, %10, %c0_i32_9 : i32
    scf.if %11 {
      %c0_10 = arith.constant 0 : index
      %c0_11 = arith.constant 0 : index
      %12 = vector.load %arg7[%c0_10, %c0_11] : memref<8x64xf32, #tpu.memory_space<vmem>>, vector<8x64xf32>
      %c0_12 = arith.constant 0 : index
      %c0_13 = arith.constant 0 : index
      %13 = vector.load %arg5[%c0_12, %c0_13] : memref<1x64xf32, #tpu.memory_space<vmem>>, vector<1x64xf32>
      %14 = vector.broadcast %13 : vector<1x64xf32> to vector<8x64xf32>
      %15 = arith.addf %12, %14 : vector<8x64xf32>
      %c0_14 = arith.constant 0 : index
      %c0_15 = arith.constant 0 : index
      %16 = vector.load %arg6[%c0_14, %c0_15] : memref<8x64xf32, #tpu.memory_space<vmem>>, vector<8x64xf32>
      tpu.vector_store %arg6[%c0_14, %c0_15], %15 {strides = array<i32>} : memref<8x64xf32, #tpu.memory_space<vmem>>, vector<8x64xf32>,
    } else {
    }
    return
  }
  func.func @transform_0(%arg0: i32, %arg1: i32, %arg2: i32) -> (i32, i32) {
    %c0_i32 = arith.constant 0 : i32
    return %arg0, %arg2 : i32, i32
  }
  func.func @transform_1(%arg0: i32, %arg1: i32, %arg2: i32) -> (i32, i32) {
    %c0_i32 = arith.constant 0 : i32
    return %arg2, %arg1 : i32, i32
  }
  func.func @transform_2(%arg0: i32, %arg1: i32, %arg2: i32) -> (i32, i32) {
    %c0_i32 = arith.constant 0 : i32
    %c0_i32_0 = arith.constant 0 : i32
    return %c0_i32, %arg1 : i32, i32
  }
  func.func @transform_3(%arg0: i32, %arg1: i32, %arg2: i32) -> (i32, i32) {
    %c0_i32 = arith.constant 0 : i32
    return %arg0, %arg1 : i32, i32
  }
}

</mosaic_0001>

<llo_original>
// kernel: tpu_custom_call.1
$region0: #{tpu_custom_call.1}
  #allocation0 [shape = 'u32[]', space=smem, size = 0x4, offset = 0x4, fixed_abs, tag = 'smem constant byte address 0x4 - core index']
  #allocation1 [shape = 'u32[144,128]{1,0:T(1,128)}', space=vmem, size = 0x12000, scoped, tag = 'internal scratch']
  #allocation2 [shape = 'f32[8,64]{1,0:T(8,128)}', space=vmem, size = 0x1000, scoped, tag = 'scratch operand']
  %s0 = inlined_call_operand.hbm [shape: f32[8,32], index: 0, kind: input, shape index: {}]
  %s1 = inlined_call_operand.hbm [shape: f32[32,64], index: 1, kind: input, shape index: {}]
  %s2 = inlined_call_operand.vmem [shape: f32[1,64], index: 2, kind: input, shape index: {}]
  %s3 = inlined_call_operand.hbm [shape: f32[8,64], index: 3, kind: output, shape index: {}]
  %s4 = sld [smem:[#allocation0]]
  $region38: #{tpu_custom_call.1} parent=0
    _
  %s6 = ssub.s32 1, %s4
  %s7 = scalar_select 0, %s6, %s4
  $region1: #{tpu_custom_call.1} parent=0
    #allocation3 [shape = 'u8[4096]{0}', space=vmem, size = 0x1000, scoped, tag = 'input window, operand 0, single buffered']
    #allocation4 [shape = 's32[1]{0}', space=sflag, size = 0x4, scoped, tag = 'scoped memory for tpu_custom_call.1']
    #allocation5 [shape = 's32[1]{0}', space=sflag, size = 0x4, scoped, tag = 'scoped memory for tpu_custom_call.1']
    #allocation6 [shape = 'u8[16384]{0}', space=vmem, size = 0x4000, scoped, tag = 'input window, operand 1, single buffered']
    #allocation7 [shape = 's32[1]{0}', space=sflag, size = 0x4, scoped, tag = 'scoped memory for tpu_custom_call.1']
    #allocation8 [shape = 'u8[4096]{0}', space=vmem, size = 0x1000, scoped, tag = 'output window, operand 0, single buffered']
    %8 = vsyncpa [#allocation4], 0
    %9 = vsyncpa [#allocation7], 0
    %10 = vsyncpa [#allocation5], 0
    // Predicated region
    $region2: #{tpu_custom_call.1} parent=1 // pred_check
      _
    $region3: #{tpu_custom_call.1} parent=1 // pred_check_branch
      %12 = sbr.rel (0) target = $region5
    $region4: #{tpu_custom_call.1} parent=1 // pred_region
      %s14 = ssub.s32 128, 128
      %15 = vsyncadd [#allocation4], %s14
      %s17 = sshll.u32 [#allocation3], 4
      %s18 = int_to_ptr.vmem [resolvable:$true] %s17
      %20 = dma.hbm_to_vmem [thread:$0]  %s0, 128, %s18, [#allocation4]
    $region5: #{tpu_custom_call.1} parent=1 // pred_fallthru
      _
    // Predicated region
    $region6: #{tpu_custom_call.1} parent=1 // pred_check
      _
    $region7: #{tpu_custom_call.1} parent=1 // pred_check_branch
      %22 = sbr.rel (0) target = $region9
    $region8: #{tpu_custom_call.1} parent=1 // pred_region
      %s24 = ssub.s32 512, 512
      %25 = vsyncadd [#allocation7], %s24
      %s26 = sshll.u32 [#allocation6], 4
      %s27 = int_to_ptr.vmem [resolvable:$true] %s26
      %32 = dma.hbm_to_vmem [thread:$0]  %s1, 512, %s27, [#allocation7], 128, 128, 8
    $region9: #{tpu_custom_call.1} parent=1 // pred_fallthru
      _
    // Predicated region
    $region10: #{tpu_custom_call.1} parent=1 // pred_check
      _
    $region11: #{tpu_custom_call.1} parent=1 // pred_check_branch
      %34 = sbr.rel (0) target = $region13
    $region12: #{tpu_custom_call.1} parent=1 // pred_region
      _
    $region13: #{tpu_custom_call.1} parent=1 // pred_fallthru
      _
    // Predicated region
    $region14: #{tpu_custom_call.1} parent=1 // pred_check
      _
    $region15: #{tpu_custom_call.1} parent=1 // pred_check_branch
      %36 = sbr.rel (0) target = $region17
    $region16: #{tpu_custom_call.1} parent=1 // pred_region
      %37 = dma.done [#allocation4], 128
    $region17: #{tpu_custom_call.1} parent=1 // pred_fallthru
      _
    // Predicated region
    $region18: #{tpu_custom_call.1} parent=1 // pred_check
      _
    $region19: #{tpu_custom_call.1} parent=1 // pred_check_branch
      %39 = sbr.rel (0) target = $region21
    $region20: #{tpu_custom_call.1} parent=1 // pred_region
      %40 = dma.done [#allocation7], 512
    $region21: #{tpu_custom_call.1} parent=1 // pred_fallthru
      _
    %p41 = scmp.eq.s32.totalorder 0, 0
    // Predicated region
    $region22: #{tpu_custom_call.1} parent=1 // pred_check
      %p42 = pneg %p41
    $region23: #{tpu_custom_call.1} parent=1 // pred_check_branch
      %44 = sbr.rel (%p42) target = $region25
    $region24: #{tpu_custom_call.1} parent=1 // pred_region
      %vm45 = vcmask 523264
      %46 = vst.msk [vmem:[#allocation2] sm:$0xff] %vm45, 0.0
    $region25: #{tpu_custom_call.1} parent=1 // pred_fallthru
      _
    %v47 = vld [vmem:[#allocation2] sm:$0xff]
    %v48 = vld [vmem:[#allocation3] sm:$0xff]
    %v49 = vld [vmem:[#allocation6] sm:$0xff]
    %v50 = vld [vmem:[#allocation6 + $0x8] sm:$0xff]
    %v51 = vld [vmem:[#allocation6 + $0x10] sm:$0xff]
    %v52 = vld [vmem:[#allocation6 + $0x18] sm:$0xff]
    %vm53 = vcmask 261120
    %v55 = vsel %vm53, %v48, 0
    %57 = vmatprep.subr.mxu0 0.0
    %v58 = vand.u32 %v49, 4294901760
    %59 = vmatpush1.msra.mxu0 %v58
    %60 = vmatprep.subr.mxu0 0.0
    %v61 = vand.u32 %v50, 4294901760
    %62 = vmatpush1.msra.mxu0 %v61
    %63 = vmatprep.subr.mxu0 0.0
    %v64 = vand.u32 %v51, 4294901760
    %65 = vmatpush1.msra.mxu0 %v64
    %66 = vmatprep.subr.mxu0 0.0
    %v67 = vand.u32 %v52, 4294901760
    %68 = vmatpush1.msra.mxu0 %v67
    %69 = vmatprep.subr.mxu0 0.0
    %70 = vmatpush1.msra.mxu0 0.0
    %71 = vmatprep.subr.mxu0 0.0
    %72 = vmatpush1.msra.mxu0 0.0
    %73 = vmatprep.subr.mxu0 0.0
    %74 = vmatpush1.msra.mxu0 0.0
    %75 = vmatprep.subr.mxu0 0.0
    %76 = vmatpush1.msra.mxu0 0.0
    %77 = vmatprep.subr.mxu0 0.0
    %78 = vmatpush1.msra.mxu0 0.0
    %79 = vmatprep.subr.mxu0 0.0
    %80 = vmatpush1.msra.mxu0 0.0
    %81 = vmatprep.subr.mxu0 0.0
    %82 = vmatpush1.msra.mxu0 0.0
    %83 = vmatprep.subr.mxu0 0.0
    %84 = vmatpush1.msra.mxu0 0.0
    %85 = vmatprep.subr.mxu0 0.0
    %86 = vmatpush1.msra.mxu0 0.0
    %87 = vmatprep.subr.mxu0 0.0
    %88 = vmatpush1.msra.mxu0 0.0
    %89 = vmatprep.subr.mxu0 0.0
    %90 = vmatpush1.msra.mxu0 0.0
    %91 = vmatprep.subr.mxu0 0.0
    %92 = vmatpush1.msra.mxu0 0.0
    %93 = vmatprep.subr.mxu0 0.0
    %94 = vmatpush1.msra.mxu0 0.0
    %95 = vmatprep.subr.mxu0 0.0
    %96 = vmatpush1.msra.mxu0 0.0
    %97 = vmatprep.subr.mxu0 0.0
    %98 = vmatpush1.msra.mxu0 0.0
    %99 = vmatprep.subr.mxu0 0.0
    %100 = vmatpush1.msra.mxu0 0.0
    %101 = vmatprep.subr.mxu0 0.0
    %102 = vmatpush1.msra.mxu0 0.0
    %103 = vmatprep.subr.mxu0 0.0
    %104 = vmatpush1.msra.mxu0 0.0
    %105 = vmatprep.subr.mxu0 0.0
    %106 = vmatpush1.msra.mxu0 0.0
    %107 = vmatprep.subr.mxu0 0.0
    %108 = vmatpush1.msra.mxu0 0.0
    %109 = vmatprep.subr.mxu0 0.0
    %110 = vmatpush1.msra.mxu0 0.0
    %111 = vmatprep.subr.mxu0 0.0
    %112 = vmatpush1.msra.mxu0 0.0
    %113 = vmatprep.subr.mxu0 0.0
    %114 = vmatpush1.msra.mxu0 0.0
    %115 = vmatprep.subr.mxu0 0.0
    %116 = vmatpush1.msra.mxu0 0.0
    %117 = vmatprep.subr.mxu0 0.0
    %118 = vmatpush1.msra.mxu0 0.0
    %119 = vmatprep.subr.mxu0 0.0
    %120 = vmatpush1.msra.mxu0 0.0
    %121 = vmatprep.subr.mxu0 0.0
    %122 = vmatpush1.msra.mxu0 0.0
    %123 = vmatprep.subr.mxu0 0.0
    %124 = vmatpush1.msra.mxu0 0.0
    %125 = vmatprep.mubr.f32.mxu0 0.0
    %v126 = vand.u32 %v55, 4294901760
    %v127 = vsub.f32 %v55, %v126
    %v128 = vand.u32 %v127, 4294901760
    %v129 = vsub.f32 %v127, %v128
    %v130 = vand.u32 %v129, 4294901760
    %131 = vmatmul.mubr.f32.gmra.mrb[0].mxu0 %v130
    %v132 = vpop.f32.mrb[0].mxu0
    %v133 = vadd.f32 0.0, %v132
    %v134 = vpop.f32.mrb[0].mxu0
    %135 = vdwg.mxu0
    %136 = vmatprep.subr.mxu0 0.0
    %v137 = vand.u32 %v49, 4294901760
    %v138 = vsub.f32 %v49, %v137
    %v139 = vand.u32 %v138, 4294901760
    %v140 = vsub.f32 %v138, %v139
    %v141 = vand.u32 %v140, 4294901760
    %142 = vmatpush1.msra.mxu0 %v141
    %143 = vmatprep.subr.mxu0 0.0
    %v144 = vand.u32 %v50, 4294901760
    %v145 = vsub.f32 %v50, %v144
    %v146 = vand.u32 %v145, 4294901760
    %v147 = vsub.f32 %v145, %v146
    %v148 = vand.u32 %v147, 4294901760
    %149 = vmatpush1.msra.mxu0 %v148
    %150 = vmatprep.subr.mxu0 0.0
    %v151 = vand.u32 %v51, 4294901760
    %v152 = vsub.f32 %v51, %v151
    %v153 = vand.u32 %v152, 4294901760
    %v154 = vsub.f32 %v152, %v153
    %v155 = vand.u32 %v154, 4294901760
    %156 = vmatpush1.msra.mxu0 %v155
    %157 = vmatprep.subr.mxu0 0.0
    %v158 = vand.u32 %v52, 4294901760
    %v159 = vsub.f32 %v52, %v158
    %v160 = vand.u32 %v159, 4294901760
    %v161 = vsub.f32 %v159, %v160
    %v162 = vand.u32 %v161, 4294901760
    %163 = vmatpush1.msra.mxu0 %v162
    %164 = vmatprep.subr.mxu0 0.0
    %165 = vmatpush1.msra.mxu0 0.0
    %166 = vmatprep.subr.mxu0 0.0
    %167 = vmatpush1.msra.mxu0 0.0
    %168 = vmatprep.subr.mxu0 0.0
    %169 = vmatpush1.msra.mxu0 0.0
    %170 = vmatprep.subr.mxu0 0.0
    %171 = vmatpush1.msra.mxu0 0.0
    %172 = vmatprep.subr.mxu0 0.0
    %173 = vmatpush1.msra.mxu0 0.0
    %174 = vmatprep.subr.mxu0 0.0
    %175 = vmatpush1.msra.mxu0 0.0
    %176 = vmatprep.subr.mxu0 0.0
    %177 = vmatpush1.msra.mxu0 0.0
    %178 = vmatprep.subr.mxu0 0.0
    %179 = vmatpush1.msra.mxu0 0.0
    %180 = vmatprep.subr.mxu0 0.0
    %181 = vmatpush1.msra.mxu0 0.0
    %182 = vmatprep.subr.mxu0 0.0
    %183 = vmatpush1.msra.mxu0 0.0
    %184 = vmatprep.subr.mxu0 0.0
    %185 = vmatpush1.msra.mxu0 0.0
    %186 = vmatprep.subr.mxu0 0.0
    %187 = vmatpush1.msra.mxu0 0.0
    %188 = vmatprep.subr.mxu0 0.0
    %189 = vmatpush1.msra.mxu0 0.0
    %190 = vmatprep.subr.mxu0 0.0
    %191 = vmatpush1.msra.mxu0 0.0
    %192 = vmatprep.subr.mxu0 0.0
    %193 = vmatpush1.msra.mxu0 0.0
    %194 = vmatprep.subr.mxu0 0.0
    %195 = vmatpush1.msra.mxu0 0.0
    %196 = vmatprep.subr.mxu0 0.0
    %197 = vmatpush1.msra.mxu0 0.0
    %198 = vmatprep.subr.mxu0 0.0
    %199 = vmatpush1.msra.mxu0 0.0
    %200 = vmatprep.subr.mxu0 0.0
    %201 = vmatpush1.msra.mxu0 0.0
    %202 = vmatprep.subr.mxu0 0.0
    %203 = vmatpush1.msra.mxu0 0.0
    %204 = vmatprep.subr.mxu0 0.0
    %205 = vmatpush1.msra.mxu0 0.0
    %206 = vmatprep.subr.mxu0 0.0
    %207 = vmatpush1.msra.mxu0 0.0
    %208 = vmatprep.subr.mxu0 0.0
    %209 = vmatpush1.msra.mxu0 0.0
    %210 = vmatprep.subr.mxu0 0.0
    %211 = vmatpush1.msra.mxu0 0.0
    %212 = vmatprep.subr.mxu0 0.0
    %213 = vmatpush1.msra.mxu0 0.0
    %214 = vmatprep.subr.mxu0 0.0
    %215 = vmatpush1.msra.mxu0 0.0
    %216 = vmatprep.subr.mxu0 0.0
    %217 = vmatpush1.msra.mxu0 0.0
    %218 = vmatprep.subr.mxu0 0.0
    %219 = vmatpush1.msra.mxu0 0.0
    %220 = vmatprep.mubr.f32.mxu0 0.0
    %v221 = vand.u32 %v55, 4294901760
    %222 = vmatmul.mubr.f32.gmra.mrb[0].mxu0 %v221
    %v223 = vpop.f32.mrb[0].mxu0
    %v224 = vadd.f32 %v133, %v223
    %v225 = vpop.f32.mrb[0].mxu0
    %226 = vdwg.mxu0
    %227 = vmatprep.subr.mxu0 0.0
    %v228 = vand.u32 %v49, 4294901760
    %v229 = vsub.f32 %v49, %v228
    %230 = vmatpush1.msra.mxu0 %v229
    %231 = vmatprep.subr.mxu0 0.0
    %v232 = vand.u32 %v50, 4294901760
    %v233 = vsub.f32 %v50, %v232
    %234 = vmatpush1.msra.mxu0 %v233
    %235 = vmatprep.subr.mxu0 0.0
    %v236 = vand.u32 %v51, 4294901760
    %v237 = vsub.f32 %v51, %v236
    %238 = vmatpush1.msra.mxu0 %v237
    %239 = vmatprep.subr.mxu0 0.0
    %v240 = vand.u32 %v52, 4294901760
    %v241 = vsub.f32 %v52, %v240
    %242 = vmatpush1.msra.mxu0 %v241
    %243 = vmatprep.subr.mxu0 0.0
    %244 = vmatpush1.msra.mxu0 0.0
    %245 = vmatprep.subr.mxu0 0.0
    %246 = vmatpush1.msra.mxu0 0.0
    %247 = vmatprep.subr.mxu0 0.0
    %248 = vmatpush1.msra.mxu0 0.0
    %249 = vmatprep.subr.mxu0 0.0
    %250 = vmatpush1.msra.mxu0 0.0
    %251 = vmatprep.subr.mxu0 0.0
    %252 = vmatpush1.msra.mxu0 0.0
    %253 = vmatprep.subr.mxu0 0.0
    %254 = vmatpush1.msra.mxu0 0.0
    %255 = vmatprep.subr.mxu0 0.0
    %256 = vmatpush1.msra.mxu0 0.0
    %257 = vmatprep.subr.mxu0 0.0
    %258 = vmatpush1.msra.mxu0 0.0
    %259 = vmatprep.subr.mxu0 0.0
    %260 = vmatpush1.msra.mxu0 0.0
    %261 = vmatprep.subr.mxu0 0.0
    %262 = vmatpush1.msra.mxu0 0.0
    %263 = vmatprep.subr.mxu0 0.0
    %264 = vmatpush1.msra.mxu0 0.0
    %265 = vmatprep.subr.mxu0 0.0
    %266 = vmatpush1.msra.mxu0 0.0
    %267 = vmatprep.subr.mxu0 0.0
    %268 = vmatpush1.msra.mxu0 0.0
    %269 = vmatprep.subr.mxu0 0.0
    %270 = vmatpush1.msra.mxu0 0.0
    %271 = vmatprep.subr.mxu0 0.0
    %272 = vmatpush1.msra.mxu0 0.0
    %273 = vmatprep.subr.mxu0 0.0
    %274 = vmatpush1.msra.mxu0 0.0
    %275 = vmatprep.subr.mxu0 0.0
    %276 = vmatpush1.msra.mxu0 0.0
    %277 = vmatprep.subr.mxu0 0.0
    %278 = vmatpush1.msra.mxu0 0.0
    %279 = vmatprep.subr.mxu0 0.0
    %280 = vmatpush1.msra.mxu0 0.0
    %281 = vmatprep.subr.mxu0 0.0
    %282 = vmatpush1.msra.mxu0 0.0
    %283 = vmatprep.subr.mxu0 0.0
    %284 = vmatpush1.msra.mxu0 0.0
    %285 = vmatprep.subr.mxu0 0.0
    %286 = vmatpush1.msra.mxu0 0.0
    %287 = vmatprep.subr.mxu0 0.0
    %288 = vmatpush1.msra.mxu0 0.0
    %289 = vmatprep.subr.mxu0 0.0
    %290 = vmatpush1.msra.mxu0 0.0
    %291 = vmatprep.subr.mxu0 0.0
    %292 = vmatpush1.msra.mxu0 0.0
    %293 = vmatprep.subr.mxu0 0.0
    %294 = vmatpush1.msra.mxu0 0.0
    %295 = vmatprep.subr.mxu0 0.0
    %296 = vmatpush1.msra.mxu0 0.0
    %297 = vmatprep.subr.mxu0 0.0
    %298 = vmatpush1.msra.mxu0 0.0
    %299 = vmatprep.mubr.f32.mxu0 0.0
    %v300 = vand.u32 %v55, 4294901760
    %v301 = vsub.f32 %v55, %v300
    %302 = vmatmul.mubr.f32.gmra.mrb[0].mxu0 %v301
    %v303 = vpop.f32.mrb[0].mxu0
    %v304 = vadd.f32 %v224, %v303
    %v305 = vpop.f32.mrb[0].mxu0
    %306 = vdwg.mxu0
    %307 = vmatprep.subr.mxu0 0.0
    %v308 = vand.u32 %v49, 4294901760
    %309 = vmatpush1.msra.mxu0 %v308
    %310 = vmatprep.subr.mxu0 0.0
    %v311 = vand.u32 %v50, 4294901760
    %312 = vmatpush1.msra.mxu0 %v311
    %313 = vmatprep.subr.mxu0 0.0
    %v314 = vand.u32 %v51, 4294901760
    %315 = vmatpush1.msra.mxu0 %v314
    %316 = vmatprep.subr.mxu0 0.0
    %v317 = vand.u32 %v52, 4294901760
    %318 = vmatpush1.msra.mxu0 %v317
    %319 = vmatprep.subr.mxu0 0.0
    %320 = vmatpush1.msra.mxu0 0.0
    %321 = vmatprep.subr.mxu0 0.0
    %322 = vmatpush1.msra.mxu0 0.0
    %323 = vmatprep.subr.mxu0 0.0
    %324 = vmatpush1.msra.mxu0 0.0
    %325 = vmatprep.subr.mxu0 0.0
    %326 = vmatpush1.msra.mxu0 0.0
    %327 = vmatprep.subr.mxu0 0.0
    %328 = vmatpush1.msra.mxu0 0.0
    %329 = vmatprep.subr.mxu0 0.0
    %330 = vmatpush1.msra.mxu0 0.0
    %331 = vmatprep.subr.mxu0 0.0
    %332 = vmatpush1.msra.mxu0 0.0
    %333 = vmatprep.subr.mxu0 0.0
    %334 = vmatpush1.msra.mxu0 0.0
    %335 = vmatprep.subr.mxu0 0.0
    %336 = vmatpush1.msra.mxu0 0.0
    %337 = vmatprep.subr.mxu0 0.0
    %338 = vmatpush1.msra.mxu0 0.0
    %339 = vmatprep.subr.mxu0 0.0
    %340 = vmatpush1.msra.mxu0 0.0
    %341 = vmatprep.subr.mxu0 0.0
    %342 = vmatpush1.msra.mxu0 0.0
    %343 = vmatprep.subr.mxu0 0.0
    %344 = vmatpush1.msra.mxu0 0.0
    %345 = vmatprep.subr.mxu0 0.0
    %346 = vmatpush1.msra.mxu0 0.0
    %347 = vmatprep.subr.mxu0 0.0
    %348 = vmatpush1.msra.mxu0 0.0
    %349 = vmatprep.subr.mxu0 0.0
    %350 = vmatpush1.msra.mxu0 0.0
    %351 = vmatprep.subr.mxu0 0.0
    %352 = vmatpush1.msra.mxu0 0.0
    %353 = vmatprep.subr.mxu0 0.0
    %354 = vmatpush1.msra.mxu0 0.0
    %355 = vmatprep.subr.mxu0 0.0
    %356 = vmatpush1.msra.mxu0 0.0
    %357 = vmatprep.subr.mxu0 0.0
    %358 = vmatpush1.msra.mxu0 0.0
    %359 = vmatprep.subr.mxu0 0.0
    %360 = vmatpush1.msra.mxu0 0.0
    %361 = vmatprep.subr.mxu0 0.0
    %362 = vmatpush1.msra.mxu0 0.0
    %363 = vmatprep.subr.mxu0 0.0
    %364 = vmatpush1.msra.mxu0 0.0
    %365 = vmatprep.subr.mxu0 0.0
    %366 = vmatpush1.msra.mxu0 0.0
    %367 = vmatprep.subr.mxu0 0.0
    %368 = vmatpush1.msra.mxu0 0.0
    %369 = vmatprep.subr.mxu0 0.0
    %370 = vmatpush1.msra.mxu0 0.0
    %371 = vmatprep.subr.mxu0 0.0
    %372 = vmatpush1.msra.mxu0 0.0
    %373 = vmatprep.subr.mxu0 0.0
    %374 = vmatpush1.msra.mxu0 0.0
    %375 = vmatprep.mubr.f32.mxu0 0.0
    %v376 = vand.u32 %v55, 4294901760
    %v377 = vsub.f32 %v55, %v376
    %v378 = vand.u32 %v377, 4294901760
    %379 = vmatmul.mubr.f32.gmra.mrb[0].mxu0 %v378
    %v380 = vpop.f32.mrb[0].mxu0
    %v381 = vadd.f32 %v304, %v380
    %v382 = vpop.f32.mrb[0].mxu0
    %383 = vdwg.mxu0
    %384 = vmatprep.subr.mxu0 0.0
    %v385 = vand.u32 %v49, 4294901760
    %v386 = vsub.f32 %v49, %v385
    %v387 = vand.u32 %v386, 4294901760
    %388 = vmatpush1.msra.mxu0 %v387
    %389 = vmatprep.subr.mxu0 0.0
    %v390 = vand.u32 %v50, 4294901760
    %v391 = vsub.f32 %v50, %v390
    %v392 = vand.u32 %v391, 4294901760
    %393 = vmatpush1.msra.mxu0 %v392
    %394 = vmatprep.subr.mxu0 0.0
    %v395 = vand.u32 %v51, 4294901760
    %v396 = vsub.f32 %v51, %v395
    %v397 = vand.u32 %v396, 4294901760
    %398 = vmatpush1.msra.mxu0 %v397
    %399 = vmatprep.subr.mxu0 0.0
    %v400 = vand.u32 %v52, 4294901760
    %v401 = vsub.f32 %v52, %v400
    %v402 = vand.u32 %v401, 4294901760
    %403 = vmatpush1.msra.mxu0 %v402
    %404 = vmatprep.subr.mxu0 0.0
    %405 = vmatpush1.msra.mxu0 0.0
    %406 = vmatprep.subr.mxu0 0.0
    %407 = vmatpush1.msra.mxu0 0.0
    %408 = vmatprep.subr.mxu0 0.0
    %409 = vmatpush1.msra.mxu0 0.0
    %410 = vmatprep.subr.mxu0 0.0
    %411 = vmatpush1.msra.mxu0 0.0
    %412 = vmatprep.subr.mxu0 0.0
    %413 = vmatpush1.msra.mxu0 0.0
    %414 = vmatprep.subr.mxu0 0.0
    %415 = vmatpush1.msra.mxu0 0.0
    %416 = vmatprep.subr.mxu0 0.0
    %417 = vmatpush1.msra.mxu0 0.0
    %418 = vmatprep.subr.mxu0 0.0
    %419 = vmatpush1.msra.mxu0 0.0
    %420 = vmatprep.subr.mxu0 0.0
    %421 = vmatpush1.msra.mxu0 0.0
    %422 = vmatprep.subr.mxu0 0.0
    %423 = vmatpush1.msra.mxu0 0.0
    %424 = vmatprep.subr.mxu0 0.0
    %425 = vmatpush1.msra.mxu0 0.0
    %426 = vmatprep.subr.mxu0 0.0
    %427 = vmatpush1.msra.mxu0 0.0
    %428 = vmatprep.subr.mxu0 0.0
    %429 = vmatpush1.msra.mxu0 0.0
    %430 = vmatprep.subr.mxu0 0.0
    %431 = vmatpush1.msra.mxu0 0.0
    %432 = vmatprep.subr.mxu0 0.0
    %433 = vmatpush1.msra.mxu0 0.0
    %434 = vmatprep.subr.mxu0 0.0
    %435 = vmatpush1.msra.mxu0 0.0
    %436 = vmatprep.subr.mxu0 0.0
    %437 = vmatpush1.msra.mxu0 0.0
    %438 = vmatprep.subr.mxu0 0.0
    %439 = vmatpush1.msra.mxu0 0.0
    %440 = vmatprep.subr.mxu0 0.0
    %441 = vmatpush1.msra.mxu0 0.0
    %442 = vmatprep.subr.mxu0 0.0
    %443 = vmatpush1.msra.mxu0 0.0
    %444 = vmatprep.subr.mxu0 0.0
    %445 = vmatpush1.msra.mxu0 0.0
    %446 = vmatprep.subr.mxu0 0.0
    %447 = vmatpush1.msra.mxu0 0.0
    %448 = vmatprep.subr.mxu0 0.0
    %449 = vmatpush1.msra.mxu0 0.0
    %450 = vmatprep.subr.mxu0 0.0
    %451 = vmatpush1.msra.mxu0 0.0
    %452 = vmatprep.subr.mxu0 0.0
    %453 = vmatpush1.msra.mxu0 0.0
    %454 = vmatprep.subr.mxu0 0.0
    %455 = vmatpush1.msra.mxu0 0.0
    %456 = vmatprep.subr.mxu0 0.0
    %457 = vmatpush1.msra.mxu0 0.0
    %458 = vmatprep.subr.mxu0 0.0
    %459 = vmatpush1.msra.mxu0 0.0
    %460 = vmatprep.mubr.f32.mxu0 0.0
    %v461 = vand.u32 %v55, 4294901760
    %462 = vmatmul.mubr.f32.gmra.mrb[0].mxu0 %v461
    %v463 = vpop.f32.mrb[0].mxu0
    %v464 = vadd.f32 %v381, %v463
    %v465 = vpop.f32.mrb[0].mxu0
    %466 = vdwg.mxu0
    %467 = vmatprep.subr.mxu0 0.0
    %v468 = vand.u32 %v49, 4294901760
    %469 = vmatpush1.msra.mxu0 %v468
    %470 = vmatprep.subr.mxu0 0.0
    %v471 = vand.u32 %v50, 4294901760
    %472 = vmatpush1.msra.mxu0 %v471
    %473 = vmatprep.subr.mxu0 0.0
    %v474 = vand.u32 %v51, 4294901760
    %475 = vmatpush1.msra.mxu0 %v474
    %476 = vmatprep.subr.mxu0 0.0
    %v477 = vand.u32 %v52, 4294901760
    %478 = vmatpush1.msra.mxu0 %v477
    %479 = vmatprep.subr.mxu0 0.0
    %480 = vmatpush1.msra.mxu0 0.0
    %481 = vmatprep.subr.mxu0 0.0
    %482 = vmatpush1.msra.mxu0 0.0
    %483 = vmatprep.subr.mxu0 0.0
    %484 = vmatpush1.msra.mxu0 0.0
    %485 = vmatprep.subr.mxu0 0.0
    %486 = vmatpush1.msra.mxu0 0.0
    %487 = vmatprep.subr.mxu0 0.0
    %488 = vmatpush1.msra.mxu0 0.0
    %489 = vmatprep.subr.mxu0 0.0
    %490 = vmatpush1.msra.mxu0 0.0
    %491 = vmatprep.subr.mxu0 0.0
    %492 = vmatpush1.msra.mxu0 0.0
    %493 = vmatprep.subr.mxu0 0.0
    %494 = vmatpush1.msra.mxu0 0.0
    %495 = vmatprep.subr.mxu0 0.0
    %496 = vmatpush1.msra.mxu0 0.0
    %497 = vmatprep.subr.mxu0 0.0
    %498 = vmatpush1.msra.mxu0 0.0
    %499 = vmatprep.subr.mxu0 0.0
    %500 = vmatpush1.msra.mxu0 0.0
    %501 = vmatprep.subr.mxu0 0.0
    %502 = vmatpush1.msra.mxu0 0.0
    %503 = vmatprep.subr.mxu0 0.0
    %504 = vmatpush1.msra.mxu0 0.0
    %505 = vmatprep.subr.mxu0 0.0
    %506 = vmatpush1.msra.mxu0 0.0
    %507 = vmatprep.subr.mxu0 0.0
    %508 = vmatpush1.msra.mxu0 0.0
    %509 = vmatprep.subr.mxu0 0.0
    %510 = vmatpush1.msra.mxu0 0.0
    %511 = vmatprep.subr.mxu0 0.0
    %512 = vmatpush1.msra.mxu0 0.0
    %513 = vmatprep.subr.mxu0 0.0
    %514 = vmatpush1.msra.mxu0 0.0
    %515 = vmatprep.subr.mxu0 0.0
    %516 = vmatpush1.msra.mxu0 0.0
    %517 = vmatprep.subr.mxu0 0.0
    %518 = vmatpush1.msra.mxu0 0.0
    %519 = vmatprep.subr.mxu0 0.0
    %520 = vmatpush1.msra.mxu0 0.0
    %521 = vmatprep.subr.mxu0 0.0
    %522 = vmatpush1.msra.mxu0 0.0
    %523 = vmatprep.subr.mxu0 0.0
    %524 = vmatpush1.msra.mxu0 0.0
    %525 = vmatprep.subr.mxu0 0.0
    %526 = vmatpush1.msra.mxu0 0.0
    %527 = vmatprep.subr.mxu0 0.0
    %528 = vmatpush1.msra.mxu0 0.0
    %529 = vmatprep.subr.mxu0 0.0
    %530 = vmatpush1.msra.mxu0 0.0
    %531 = vmatprep.subr.mxu0 0.0
    %532 = vmatpush1.msra.mxu0 0.0
    %533 = vmatprep.subr.mxu0 0.0
    %534 = vmatpush1.msra.mxu0 0.0
    %535 = vmatprep.mubr.f32.mxu0 0.0
    %v536 = vand.u32 %v55, 4294901760
    %537 = vmatmul.mubr.f32.gmra.mrb[0].mxu0 %v536
    %v538 = vpop.f32.mrb[0].mxu0
    %v539 = vadd.f32 %v464, %v538
    %v540 = vpop.f32.mrb[0].mxu0
    %541 = vdwg.mxu0
    %v542 = vadd.f32 %v47, %v539
    %vm543 = vcmask 523264
    %544 = vst.msk [vmem:[#allocation2] sm:$0xff] %vm543, %v542
    // Predicated region
    $region26: #{tpu_custom_call.1} parent=1 // pred_check
      %p545 = pneg %p41
    $region27: #{tpu_custom_call.1} parent=1 // pred_check_branch
      %547 = sbr.rel (%p545) target = $region29
    $region28: #{tpu_custom_call.1} parent=1 // pred_region
      %v548 = vld [vmem:[#allocation2] sm:$0xff]
      %v549 = vld [vmem:[%s2] sm:$0x1]
      %v551 = vlaneseq
      %v552 = vshrl.u32 %v551, 7
      %v553 = vsub.s32 0, %v552
      %v554 = vrot.slane %v549, %v553
      %v556 = vadd.f32 %v548, %v554
      %557 = vst.msk [vmem:[#allocation8] sm:$0xff] %vm543, %v556
    $region29: #{tpu_custom_call.1} parent=1 // pred_fallthru
      _
    // Predicated region
    $region30: #{tpu_custom_call.1} parent=1 // pred_check
      _
    $region31: #{tpu_custom_call.1} parent=1 // pred_check_branch
      %559 = sbr.rel (0) target = $region33
    $region32: #{tpu_custom_call.1} parent=1 // pred_region
      %s561 = ssub.s32 128, 128
      %562 = vsyncadd [#allocation5], %s561
      %s564 = sshll.u32 [#allocation8], 4
      %s565 = int_to_ptr.vmem [resolvable:$true] %s564
      %567 = dma.vmem_to_hbm [thread:$0]  %s565, 128, %s3, [#allocation5]
    $region33: #{tpu_custom_call.1} parent=1 // pred_fallthru
      _
    // Predicated region
    $region34: #{tpu_custom_call.1} parent=1 // pred_check
      _
    $region35: #{tpu_custom_call.1} parent=1 // pred_check_branch
      %569 = sbr.rel (0) target = $region37
    $region36: #{tpu_custom_call.1} parent=1 // pred_region
      %570 = dma.done [#allocation5], 128
    $region37: #{tpu_custom_call.1} parent=1 // pred_fallthru
      _
    %571 = vsyncpa [#allocation4], 1
    %572 = vsyncpa [#allocation7], 1
    %573 = vsyncpa [#allocation5], 1

</llo_original>
